<compile_context>
chip_gen: v7x
topology: tpu7x:2x2x1
jax: 0.10.0
libtpu: 0.0.40
codegen_flags: <defaults>
</compile_context>

<pallas_src>
import jax
import jax.numpy as jnp
import numpy as np
from jax.experimental import pallas as pl
from jax.experimental.pallas import tpu as pltpu


def _residual_block_kernel(x_ref, w1_ref, w2_ref, out_ref):
    # x_ref:   (1, H+2, (W+2)*C)  spatially zero-padded, lane-flattened NHWC image
    # w1_ref:  (3, (W+2)*C, (W+2)*C)   banded (block-Toeplitz) conv1 weights, dy-major
    # w2_ref:  (3, (W+2)*C, (W+2)*C)   conv2 weights, same layout
    # out_ref: (1, H, (W+2)*C)    W-padded output layout (border lanes zero); Cout == C
    H = out_ref.shape[1]
    xp = x_ref[0]                                                   # (H+2, WpC)

    def conv3x3(fp, w_ref):
        # fp: (H+2, Wp*Ci) padded rows -> (H, Wp*Co) f32; output border columns stay zero
        acc = jnp.dot(fp[0:H, :], w_ref[0], preferred_element_type=jnp.float32)
        acc = acc + jnp.dot(fp[1:H + 1, :], w_ref[1], preferred_element_type=jnp.float32)
        acc = acc + jnp.dot(fp[2:H + 2, :], w_ref[2], preferred_element_type=jnp.float32)
        return acc

    y = jnp.maximum(conv3x3(xp, w1_ref), 0.0).astype(xp.dtype)      # conv1 + ReLU (W-padded layout)
    zrow = jnp.zeros((1, y.shape[1]), y.dtype)
    yp = jnp.concatenate([zrow, y, zrow], axis=0)                   # re-add H padding (sublane concat)
    out = conv3x3(yp, w2_ref)                                       # conv2
    out = jnp.maximum(out + xp[1:H + 1, :].astype(jnp.float32), 0.0)  # identity add + ReLU
    out_ref[0] = out.astype(out_ref.dtype)                          # lane-dense store


def _toeplitz_conv_weights(w_oihw, W):
    """torch OIHW (Co, Ci, 3, 3) -> (3, (W+2)*Ci, (W+2)*Co) banded weights.

    For each kernel row dy:  T[dy][(w+dx)*Ci + ci, (w+1)*Co + co] = w[co, ci, dy, dx],
    so one matmul of a W-padded lane-flattened row slab against T[dy] produces that
    row's contribution for every output pixel at once.  Output border columns
    (padded positions 0 and W+1) are never written -> stay zero.
    """
    Co, Ci, kh, kw = w_oihw.shape
    assert (kh, kw) == (3, 3)
    Wp = W + 2
    wr = jnp.transpose(jnp.asarray(w_oihw), (2, 3, 1, 0))            # (dy, dx, ci, co)
    T = jnp.zeros((3, Wp, Ci, Wp, Co), wr.dtype)
    for dx in range(3):
        for w in range(W):
            T = T.at[:, w + dx, :, w + 1, :].add(wr[:, dx])
    return T.reshape(3, Wp * Ci, Wp * Co)


def residual_block(x_nchw, w1_oihw, w2_oihw, *, compute_dtype=jnp.float32):
    """Pallas ResidualBlock forward. x_nchw: (N, C, H, W); weights in torch OIHW layout."""
    N, C, H, W = x_nchw.shape
    Cout = w1_oihw.shape[0]
    assert w1_oihw.shape == (Cout, C, 3, 3) and w2_oihw.shape == (Cout, Cout, 3, 3)
    # TODO(synk): downsample module is None in this config (identity residual path only);
    # a non-None downsample (e.g. strided 1x1 conv) is not implemented.
    assert Cout == C, "downsample=None requires in_channels == out_channels"
    Wp = W + 2

    # NCHW -> NHWC, zero-pad the spatial border once on the host, lane-flatten W and C.
    x = jnp.transpose(x_nchw, (0, 2, 3, 1)).astype(compute_dtype)
    x = jnp.pad(x, ((0, 0), (1, 1), (1, 1), (0, 0))).reshape(N, H + 2, Wp * C)
    w1 = _toeplitz_conv_weights(w1_oihw, W).astype(compute_dtype)    # (3, Wp*C, Wp*Cout)
    w2 = _toeplitz_conv_weights(w2_oihw, W).astype(compute_dtype)    # (3, Wp*Cout, Wp*Cout)

    out_pad = pl.pallas_call(
        _residual_block_kernel,
        out_shape=jax.ShapeDtypeStruct((N, H, Wp * Cout), compute_dtype),
        grid_spec=pltpu.PrefetchScalarGridSpec(
            num_scalar_prefetch=0,
            # One image per grid step; "parallel" lets megacore / v7x's 2 TCs split the batch.
            grid=(N,),
            in_specs=[
                pl.BlockSpec((1, H + 2, Wp * C), lambda n: (n, 0, 0)),
                pl.BlockSpec((3, Wp * C, Wp * Cout), lambda n: (0, 0, 0)),     # weights resident
                pl.BlockSpec((3, Wp * Cout, Wp * Cout), lambda n: (0, 0, 0)),
            ],
            out_specs=pl.BlockSpec((1, H, Wp * Cout), lambda n: (n, 0, 0)),
        ),
        compiler_params=pltpu.CompilerParams(dimension_semantics=("parallel",)),
    )(x, w1, w2)

    # Drop the W padding, reshape back to NCHW.
    out = out_pad.astype(jnp.float32).reshape(N, H, Wp, Cout)[:, :, 1:W + 1, :]
    return jnp.transpose(out, (0, 3, 1, 2))


def residual_block_ref(x_nchw, w1_oihw, w2_oihw):
    """Pure-JAX reference with identical semantics (for the correctness check)."""
    def conv3x3(x_nhwc, w_oihw):
        wr = jnp.transpose(w_oihw, (2, 3, 1, 0))                      # (3,3,Ci,Co)
        H, W = x_nhwc.shape[1], x_nhwc.shape[2]
        pad = jnp.pad(x_nhwc, ((0, 0), (1, 1), (1, 1), (0, 0)))
        out = jnp.zeros(x_nhwc.shape[:3] + (w_oihw.shape[0],), jnp.float32)
        for dy in range(3):
            for dx in range(3):
                out = out + jnp.einsum(
                    "nhwi,io->nhwo", pad[:, dy:dy + H, dx:dx + W, :], wr[dy, dx],
                    precision=jax.lax.Precision.HIGHEST)
        return out

    x = jnp.transpose(x_nchw, (0, 2, 3, 1)).astype(jnp.float32)
    y = jnp.maximum(conv3x3(x, w1_oihw), 0.0)
    y = conv3x3(y, w2_oihw) + x
    y = jnp.maximum(y, 0.0)
    return jnp.transpose(y, (0, 3, 1, 2))


if __name__ == "__main__":
    key = jax.random.PRNGKey(0)
    k_x, k_w1, k_w2 = jax.random.split(key, 3)

    N, C, H, W = 2, 4, 16, 16                       # in_channels == out_channels == 4
    x = jax.random.normal(k_x, (N, C, H, W), jnp.float32)
    w1 = jax.random.normal(k_w1, (C, C, 3, 3), jnp.float32) * 0.1    # conv1 weight (OIHW)
    w2 = jax.random.normal(k_w2, (C, C, 3, 3), jnp.float32) * 0.1    # conv2 weight (OIHW)

    out = residual_block(x, w1, w2)                 # f32 path (parity with the torch reference)
    out = jax.block_until_ready(out)

    ref = residual_block_ref(x, w1, w2)
    np.testing.assert_allclose(np.asarray(out), np.asarray(ref), rtol=5e-3, atol=5e-3)
    print("KERNEL_OK")
</pallas_src>

<mosaic_0001>
module attributes {stable_mosaic.version = 11 : i64} {
  func.func @_residual_block_kernel(%arg0: i32, %arg1: memref<1x18x72xf32, #tpu.memory_space<vmem>>, %arg2: memref<3x72x72xf32, #tpu.memory_space<vmem>>, %arg3: memref<3x72x72xf32, #tpu.memory_space<vmem>>, %arg4: memref<1x16x72xf32, #tpu.memory_space<vmem>>) attributes {dimension_semantics = [#tpu.dimension_semantics<parallel>], iteration_bounds = array<i64: 2>, scalar_prefetch = 0 : i64, scratch_operands = 0 : i64, tpu.core_type = #tpu.core_type<tc>, window_params = [{transform_indices = @transform_0, window_bounds = array<i64: 1, 18, 72>}, {pipeline_mode = #tpu.pipeline_mode<synchronous>, transform_indices = @transform_1, window_bounds = array<i64: 3, 72, 72>}, {pipeline_mode = #tpu.pipeline_mode<synchronous>, transform_indices = @transform_2, window_bounds = array<i64: 3, 72, 72>}, {transform_indices = @transform_3, window_bounds = array<i64: 1, 16, 72>}]} {
    %c0 = arith.constant 0 : index
    %c0_0 = arith.constant 0 : index
    %c0_1 = arith.constant 0 : index
    %0 = vector.load %arg1[%c0, %c0_0, %c0_1] : memref<1x18x72xf32, #tpu.memory_space<vmem>>, vector<1x18x72xf32>
    %1 = vector.shape_cast %0 : vector<1x18x72xf32> to vector<18x72xf32>
    %2 = vector.extract_strided_slice %1 {offsets = [0, 0], sizes = [16, 72], strides = [1, 1]} : vector<18x72xf32> to vector<16x72xf32>
    %c0_2 = arith.constant 0 : index
    %c0_3 = arith.constant 0 : index
    %c0_4 = arith.constant 0 : index
    %3 = vector.load %arg2[%c0_2, %c0_3, %c0_4] : memref<3x72x72xf32, #tpu.memory_space<vmem>>, vector<1x72x72xf32>
    %4 = vector.shape_cast %3 : vector<1x72x72xf32> to vector<72x72xf32>
    %cst = arith.constant dense<0.000000e+00> : vector<16x72xf32>
    %5 = tpu.matmul %2, %4, %cst {dimension_numbers = #tpu.dot_dimension_numbers<[1], [0], [0], [1], [0, 0, 1, 1], [], []>} : vector<16x72xf32>, vector<72x72xf32>, vector<16x72xf32> -> vector<16x72xf32>
    %6 = vector.extract_strided_slice %1 {offsets = [1, 0], sizes = [16, 72], strides = [1, 1]} : vector<18x72xf32> to vector<16x72xf32>
    %c1 = arith.constant 1 : index
    %c0_5 = arith.constant 0 : index
    %c0_6 = arith.constant 0 : index
    %7 = vector.load %arg2[%c1, %c0_5, %c0_6] : memref<3x72x72xf32, #tpu.memory_space<vmem>>, vector<1x72x72xf32>
    %8 = vector.shape_cast %7 : vector<1x72x72xf32> to vector<72x72xf32>
    %cst_7 = arith.constant dense<0.000000e+00> : vector<16x72xf32>
    %9 = tpu.matmul %6, %8, %cst_7 {dimension_numbers = #tpu.dot_dimension_numbers<[1], [0], [0], [1], [0, 0, 1, 1], [], []>} : vector<16x72xf32>, vector<72x72xf32>, vector<16x72xf32> -> vector<16x72xf32>
    %10 = arith.addf %5, %9 : vector<16x72xf32>
    %11 = vector.extract_strided_slice %1 {offsets = [2, 0], sizes = [16, 72], strides = [1, 1]} : vector<18x72xf32> to vector<16x72xf32>
    %c2 = arith.constant 2 : index
    %c0_8 = arith.constant 0 : index
    %c0_9 = arith.constant 0 : index
    %12 = vector.load %arg2[%c2, %c0_8, %c0_9] : memref<3x72x72xf32, #tpu.memory_space<vmem>>, vector<1x72x72xf32>
    %13 = vector.shape_cast %12 : vector<1x72x72xf32> to vector<72x72xf32>
    %cst_10 = arith.constant dense<0.000000e+00> : vector<16x72xf32>
    %14 = tpu.matmul %11, %13, %cst_10 {dimension_numbers = #tpu.dot_dimension_numbers<[1], [0], [0], [1], [0, 0, 1, 1], [], []>} : vector<16x72xf32>, vector<72x72xf32>, vector<16x72xf32> -> vector<16x72xf32>
    %15 = arith.addf %10, %14 : vector<16x72xf32>
    %cst_11 = arith.constant 0.000000e+00 : f32
    %16 = vector.broadcast %cst_11 : f32 to vector<16x72xf32>
    %17 = arith.maximumf %15, %16 : vector<16x72xf32>
    %cst_12 = arith.constant 0.000000e+00 : f32
    %18 = vector.broadcast %cst_12 : f32 to vector<1x72xf32>
    %19 = tpu.concatenate %18, %17, %18 in 0 : vector<1x72xf32>, vector<16x72xf32>, vector<1x72xf32> -> vector<18x72xf32>
    %20 = vector.extract_strided_slice %19 {offsets = [0, 0], sizes = [16, 72], strides = [1, 1]} : vector<18x72xf32> to vector<16x72xf32>
    %c0_13 = arith.constant 0 : index
    %c0_14 = arith.constant 0 : index
    %c0_15 = arith.constant 0 : index
    %21 = vector.load %arg3[%c0_13, %c0_14, %c0_15] : memref<3x72x72xf32, #tpu.memory_space<vmem>>, vector<1x72x72xf32>
    %22 = vector.shape_cast %21 : vector<1x72x72xf32> to vector<72x72xf32>
    %cst_16 = arith.constant dense<0.000000e+00> : vector<16x72xf32>
    %23 = tpu.matmul %20, %22, %cst_16 {dimension_numbers = #tpu.dot_dimension_numbers<[1], [0], [0], [1], [0, 0, 1, 1], [], []>} : vector<16x72xf32>, vector<72x72xf32>, vector<16x72xf32> -> vector<16x72xf32>
    %24 = vector.extract_strided_slice %19 {offsets = [1, 0], sizes = [16, 72], strides = [1, 1]} : vector<18x72xf32> to vector<16x72xf32>
    %c1_17 = arith.constant 1 : index
    %c0_18 = arith.constant 0 : index
    %c0_19 = arith.constant 0 : index
    %25 = vector.load %arg3[%c1_17, %c0_18, %c0_19] : memref<3x72x72xf32, #tpu.memory_space<vmem>>, vector<1x72x72xf32>
    %26 = vector.shape_cast %25 : vector<1x72x72xf32> to vector<72x72xf32>
    %cst_20 = arith.constant dense<0.000000e+00> : vector<16x72xf32>
    %27 = tpu.matmul %24, %26, %cst_20 {dimension_numbers = #tpu.dot_dimension_numbers<[1], [0], [0], [1], [0, 0, 1, 1], [], []>} : vector<16x72xf32>, vector<72x72xf32>, vector<16x72xf32> -> vector<16x72xf32>
    %28 = arith.addf %23, %27 : vector<16x72xf32>
    %29 = vector.extract_strided_slice %19 {offsets = [2, 0], sizes = [16, 72], strides = [1, 1]} : vector<18x72xf32> to vector<16x72xf32>
    %c2_21 = arith.constant 2 : index
    %c0_22 = arith.constant 0 : index
    %c0_23 = arith.constant 0 : index
    %30 = vector.load %arg3[%c2_21, %c0_22, %c0_23] : memref<3x72x72xf32, #tpu.memory_space<vmem>>, vector<1x72x72xf32>
    %31 = vector.shape_cast %30 : vector<1x72x72xf32> to vector<72x72xf32>
    %cst_24 = arith.constant dense<0.000000e+00> : vector<16x72xf32>
    %32 = tpu.matmul %29, %31, %cst_24 {dimension_numbers = #tpu.dot_dimension_numbers<[1], [0], [0], [1], [0, 0, 1, 1], [], []>} : vector<16x72xf32>, vector<72x72xf32>, vector<16x72xf32> -> vector<16x72xf32>
    %33 = arith.addf %28, %32 : vector<16x72xf32>
    %34 = vector.extract_strided_slice %1 {offsets = [1, 0], sizes = [16, 72], strides = [1, 1]} : vector<18x72xf32> to vector<16x72xf32>
    %35 = arith.addf %33, %34 : vector<16x72xf32>
    %cst_25 = arith.constant 0.000000e+00 : f32
    %36 = vector.broadcast %cst_25 : f32 to vector<16x72xf32>
    %37 = arith.maximumf %35, %36 : vector<16x72xf32>
    %c0_26 = arith.constant 0 : index
    %c0_27 = arith.constant 0 : index
    %c0_28 = arith.constant 0 : index
    %38 = vector.load %arg4[%c0_26, %c0_27, %c0_28] : memref<1x16x72xf32, #tpu.memory_space<vmem>>, vector<1x16x72xf32>
    %39 = vector.shape_cast %38 : vector<1x16x72xf32> to vector<16x72xf32>
    %40 = vector.shape_cast %37 : vector<16x72xf32> to vector<1x16x72xf32>
    tpu.vector_store %arg4[%c0_26, %c0_27, %c0_28], %40 {strides = array<i32>} : memref<1x16x72xf32, #tpu.memory_space<vmem>>, vector<1x16x72xf32>,
    return
  }
  func.func @transform_0(%arg0: i32) -> (i32, i32, i32) {
    %c0_i32 = arith.constant 0 : i32
    %c0_i32_0 = arith.constant 0 : i32
    %c0_i32_1 = arith.constant 0 : i32
    return %arg0, %c0_i32, %c0_i32_0 : i32, i32, i32
  }
  func.func @transform_1(%arg0: i32) -> (i32, i32, i32) {
    %c0_i32 = arith.constant 0 : i32
    %c0_i32_0 = arith.constant 0 : i32
    %c0_i32_1 = arith.constant 0 : i32
    %c0_i32_2 = arith.constant 0 : i32
    return %c0_i32, %c0_i32_0, %c0_i32_1 : i32, i32, i32
  }
  func.func @transform_2(%arg0: i32) -> (i32, i32, i32) {
    %c0_i32 = arith.constant 0 : i32
    %c0_i32_0 = arith.constant 0 : i32
    %c0_i32_1 = arith.constant 0 : i32
    %c0_i32_2 = arith.constant 0 : i32
    return %c0_i32, %c0_i32_0, %c0_i32_1 : i32, i32, i32
  }
  func.func @transform_3(%arg0: i32) -> (i32, i32, i32) {
    %c0_i32 = arith.constant 0 : i32
    %c0_i32_0 = arith.constant 0 : i32
    %c0_i32_1 = arith.constant 0 : i32
    return %arg0, %c0_i32, %c0_i32_0 : i32, i32, i32
  }
}

</mosaic_0001>

<llo_original>
// kernel: tpu_custom_call.1
$region0: #{tpu_custom_call.1}
  #allocation0 [shape = 'u32[]', space=smem, size = 0x4, offset = 0x4, fixed_abs, tag = 'smem constant byte address 0x4 - core index']
  #allocation1 [shape = 'u32[144,128]{1,0:T(1,128)}', space=vmem, size = 0x12000, scoped, tag = 'internal scratch']
  %s0 = inlined_call_operand.vmem [shape: f32[2,18,72], index: 0, kind: input, shape index: {}]
  %s1 = inlined_call_operand.hbm [shape: f32[3,72,72], index: 1, kind: input, shape index: {}]
  %s2 = inlined_call_operand.hbm [shape: f32[3,72,72], index: 2, kind: input, shape index: {}]
  %s3 = inlined_call_operand.hbm [shape: f32[2,16,72], index: 3, kind: output, shape index: {}]
  %s4 = sld [smem:[#allocation0]]
  $region53: #{tpu_custom_call.1} parent=0
    _
  %s6 = ssub.s32 1, %s4
  %s7 = scalar_select 0, %s6, %s4
  $region1: #{tpu_custom_call.1} parent=0
    #allocation2 [shape = 'u8[110592]{0}', space=vmem, size = 0x1b000, scoped, tag = 'input window, operand 1, single buffered']
    #allocation3 [shape = 's32[2]{0}', space=sflag, size = 0x8, scoped, tag = 'scoped memory for tpu_custom_call.1']
    #allocation4 [shape = 's32[2]{0}', space=sflag, size = 0x8, scoped, tag = 'scoped memory for tpu_custom_call.1']
    #allocation5 [shape = 'u8[110592]{0}', space=vmem, size = 0x1b000, scoped, tag = 'input window, operand 2, single buffered']
    #allocation6 [shape = 's32[1]{0}', space=sflag, size = 0x4, scoped, tag = 'scoped memory for tpu_custom_call.1']
    #allocation7 [shape = 'u8[16384]{0}', space=vmem, size = 0x4000, scoped, tag = 'output window, operand 0']
    %8 = vsyncpa [#allocation3], 0
    %9 = vsyncpa [#allocation6], 0
    %10 = vsyncpa [#allocation4], 0
    %s11 = scalar_lea.sflag [#allocation4], 1
    %12 = vsyncpa %s11, 0
    loop: start=0, step=1, limit=4
    $region2: #{tpu_custom_call.1} parent=1 // loop_pre_header
      _
    $region3: #{tpu_custom_call.1} parent=1 // loop_header
      %s14 = sphi 0, %s18
      %p15 = scmp.ge.s32.totalorder %s14, 4
      %s24 = sphi 0, %s26
      %s27 = sphi 0, %s24
      %s28 = sphi 0, %s27
      %s44 = sphi 0, %s28
      %s48 = sphi 0, %s48
      %s50 = sphi 0, %s48
      %s51 = sphi 0, %s50
      %s65 = sphi 0, %s51
      %s69 = sphi 0, %s69
      %s71 = sphi 0, %s69
      %s72 = sphi 0, %s71
      %s86 = sphi 0, %s72
      %s92 = sphi 0, %s94
      %s95 = sphi 0, %s92
      %s96 = sphi 0, %s95
      %s112 = sphi 0, %s96
    $region4: #{tpu_custom_call.1} parent=1 // loop_header_branch
      %17 = sbr.rel (%p15) target = $region8
    $region5: #{tpu_custom_call.1} parent=1 // loop_body
      %s19 = ssub.s32 %s14, 1
      %s20 = ssub.s32 %s14, 2
      %s21 = sadd.s32 %s14, 1
      %s22 = ssub.s32 %s14, %s21
      %p23 = scmp.eq.s32.totalorder %s22, 0
      %s25 = sadd.s32 %s24, 1
      %s26 = scalar_select %p23, %s24, %s25
      %p29 = pneg %p23
      %p30 = scmp.eq.s32.totalorder %s14, 1
      %p31 = por %p29, %p30
      %p32 = scmp.ne.s32.totalorder %s24, %s27
      %p33 = scmp.eq.s32.totalorder %s14, 0
      %p34 = por %p32, %p33
      %p35 = scmp.ne.s32.totalorder %s24, %s27
      %p36 = scmp.eq.s32.totalorder %s19, 1
      %p37 = por %p35, %p36
      %p38 = scmp.ne.s32.totalorder %s27, %s28
      %p39 = scmp.eq.s32.totalorder %s19, 0
      %p40 = por %p38, %p39
      %p41 = scmp.ne.s32.totalorder %s27, %s28
      %p42 = scmp.eq.s32.totalorder %s20, 1
      %p43 = por %p41, %p42
      %p45 = scmp.ne.s32.totalorder %s28, %s44
      %p46 = scmp.eq.s32.totalorder %s20, 0
      %p47 = por %p45, %p46
      %s49 = sadd.s32 %s48, 1
      %p52 = scmp.eq.s32.totalorder %s14, 1
      %p53 = scmp.ne.s32.totalorder %s48, %s50
      %p54 = scmp.eq.s32.totalorder %s14, 0
      %p55 = por %p53, %p54
      %p56 = scmp.ne.s32.totalorder %s48, %s50
      %p57 = scmp.eq.s32.totalorder %s19, 1
      %p58 = por %p56, %p57
      %p59 = scmp.ne.s32.totalorder %s50, %s51
      %p60 = scmp.eq.s32.totalorder %s19, 0
      %p61 = por %p59, %p60
      %p62 = scmp.ne.s32.totalorder %s50, %s51
      %p63 = scmp.eq.s32.totalorder %s20, 1
      %p64 = por %p62, %p63
      %p66 = scmp.ne.s32.totalorder %s51, %s65
      %p67 = scmp.eq.s32.totalorder %s20, 0
      %p68 = por %p66, %p67
      %s70 = sadd.s32 %s69, 1
      %p73 = scmp.eq.s32.totalorder %s14, 1
      %p74 = scmp.ne.s32.totalorder %s69, %s71
      %p75 = scmp.eq.s32.totalorder %s14, 0
      %p76 = por %p74, %p75
      %p77 = scmp.ne.s32.totalorder %s69, %s71
      %p78 = scmp.eq.s32.totalorder %s19, 1
      %p79 = por %p77, %p78
      %p80 = scmp.ne.s32.totalorder %s71, %s72
      %p81 = scmp.eq.s32.totalorder %s19, 0
      %p82 = por %p80, %p81
      %p83 = scmp.ne.s32.totalorder %s71, %s72
      %p84 = scmp.eq.s32.totalorder %s20, 1
      %p85 = por %p83, %p84
      %p87 = scmp.ne.s32.totalorder %s72, %s86
      %p88 = scmp.eq.s32.totalorder %s20, 0
      %p89 = por %p87, %p88
      %s90 = ssub.s32 %s14, %s21
      %p91 = scmp.eq.s32.totalorder %s90, 0
      %s93 = sadd.s32 %s92, 1
      %s94 = scalar_select %p91, %s92, %s93
      %p97 = pneg %p91
      %p98 = scmp.eq.s32.totalorder %s14, 1
      %p99 = por %p97, %p98
      %p100 = scmp.ne.s32.totalorder %s92, %s95
      %p101 = scmp.eq.s32.totalorder %s14, 0
      %p102 = por %p100, %p101
      %p103 = scmp.ne.s32.totalorder %s92, %s95
      %p104 = scmp.eq.s32.totalorder %s19, 1
      %p105 = por %p103, %p104
      %p106 = scmp.ne.s32.totalorder %s95, %s96
      %p107 = scmp.eq.s32.totalorder %s19, 0
      %p108 = por %p106, %p107
      %p109 = scmp.ne.s32.totalorder %s95, %s96
      %p110 = scmp.eq.s32.totalorder %s20, 1
      %p111 = por %p109, %p110
      %p113 = scmp.ne.s32.totalorder %s96, %s112
      %p114 = scmp.eq.s32.totalorder %s20, 0
      %p115 = por %p113, %p114
      %p116 = scmp.le.s32.totalorder 1, %s14
      %p117 = scmp.lt.s32.totalorder %s14, 3
      %p118 = pnand %p116, %p117
      %p119 = pneg %p118
      // Predicated region
      $region9: #{tpu_custom_call.1} parent=5 // pred_check
        _
      $region10: #{tpu_custom_call.1} parent=5 // pred_check_branch
        %121 = sbr.rel (%p118) target = $region12
      $region11: #{tpu_custom_call.1} parent=5 // pred_region
        %s122 = ssub.s32 %s14, 1
        // Predicated region
        $region13: #{tpu_custom_call.1} parent=11 // pred_check
          %p123 = pneg %p61
        $region14: #{tpu_custom_call.1} parent=11 // pred_check_branch
          %125 = sbr.rel (%p123) target = $region16
        $region15: #{tpu_custom_call.1} parent=11 // pred_region
          %s127 = ssub.s32 3456, 3456
          %128 = vsyncadd [#allocation3], %s127
          %s129 = sshll.u32 [#allocation2], 4
          %s130 = int_to_ptr.vmem [resolvable:$true] %s129
          %135 = dma.hbm_to_vmem [thread:$0]  %s1, 3456, %s130, [#allocation3], 128, 128, 8
        $region16: #{tpu_custom_call.1} parent=11 // pred_fallthru
          _
        // Predicated region
        $region17: #{tpu_custom_call.1} parent=11 // pred_check
          %p136 = pneg %p82
        $region18: #{tpu_custom_call.1} parent=11 // pred_check_branch
          %138 = sbr.rel (%p136) target = $region20
        $region19: #{tpu_custom_call.1} parent=11 // pred_region
          %s140 = ssub.s32 3456, 3456
          %141 = vsyncadd [#allocation6], %s140
          %s142 = sshll.u32 [#allocation5], 4
          %s143 = int_to_ptr.vmem [resolvable:$true] %s142
          %148 = dma.hbm_to_vmem [thread:$0]  %s2, 3456, %s143, [#allocation6], 128, 128, 8
        $region20: #{tpu_custom_call.1} parent=11 // pred_fallthru
          _
      $region12: #{tpu_custom_call.1} parent=5 // pred_fallthru
        _
      %p149 = scmp.lt.s32.totalorder %s14, 2
      // Predicated region
      $region21: #{tpu_custom_call.1} parent=5 // pred_check
        %p150 = pneg %p149
      $region22: #{tpu_custom_call.1} parent=5 // pred_check_branch
        %152 = sbr.rel (%p150) target = $region24
      $region23: #{tpu_custom_call.1} parent=5 // pred_region
        // Predicated region
        $region25: #{tpu_custom_call.1} parent=23 // pred_check
          %p153 = pneg %p34
        $region26: #{tpu_custom_call.1} parent=23 // pred_check_branch
          %155 = sbr.rel (%p153) target = $region28
        $region27: #{tpu_custom_call.1} parent=23 // pred_region
          %p156 = scmp.lt.s32.totalorder %s14, 1
          %s157 = scalar_select %p156, %s14, 1
          %s158 = smul.addr %s157, 3
          %s159 = smul.addr %s158, 8
          %s160 = scalar_lea.vmem %s0, %s159
        $region28: #{tpu_custom_call.1} parent=23 // pred_fallthru
          _
      $region24: #{tpu_custom_call.1} parent=5 // pred_fallthru
        _
      %p161 = scmp.le.s32.totalorder 1, %s14
      %p162 = scmp.lt.s32.totalorder %s14, 3
      %p163 = pnand %p161, %p162
      %p164 = pneg %p163
      // Predicated region
      $region29: #{tpu_custom_call.1} parent=5 // pred_check
        _
      $region30: #{tpu_custom_call.1} parent=5 // pred_check_branch
        %166 = sbr.rel (%p163) target = $region32
      $region31: #{tpu_custom_call.1} parent=5 // pred_region
        %s167 = ssub.s32 %s14, 1
        // Predicated region
        $region33: #{tpu_custom_call.1} parent=31 // pred_check
          %p168 = pneg %p61
        $region34: #{tpu_custom_call.1} parent=31 // pred_check_branch
          %170 = sbr.rel (%p168) target = $region36
        $region35: #{tpu_custom_call.1} parent=31 // pred_region
          %171 = dma.done [#allocation3], 3456
        $region36: #{tpu_custom_call.1} parent=31 // pred_fallthru
          _
        // Predicated region
        $region37: #{tpu_custom_call.1} parent=31 // pred_check
          %p172 = pneg %p82
        $region38: #{tpu_custom_call.1} parent=31 // pred_check_branch
          %174 = sbr.rel (%p172) target = $region40
        $region39: #{tpu_custom_call.1} parent=31 // pred_region
          %175 = dma.done [#allocation6], 3456
        $region40: #{tpu_custom_call.1} parent=31 // pred_fallthru
          _
        %p176 = scmp.lt.s32.totalorder %s19, 1
        %s177 = scalar_select %p176, %s19, 1
        %s178 = smul.addr %s177, 3
        %s179 = smul.addr %s178, 8
        %s180 = scalar_lea.vmem %s0, %s179
        %p181 = pneg %p40
        %p182 = pneg %p37
        %p183 = pneg %p61
        %p184 = pneg %p58
        %p185 = pneg %p82
        %p186 = pneg %p79
        %p187 = pneg %p108
        %p188 = pneg %p105
        %s189 = sand.u32 %s95, 1
        %s190 = scalar_lea.sflag [#allocation4], %s189
        %s191 = sand.u32 %s95, 1
        %s192 = smul.addr %s191, 16
        %s193 = scalar_lea.vmem [#allocation7], %s192
        %p194 = scmp.lt.s32.totalorder %s19, 1
        %s195 = scalar_select %p194, %s19, 1
        %s196 = smul.addr %s195, 3
        %s197 = smul.addr %s196, 8
        %s198 = scalar_lea.vmem %s0, %s197
        %v199 = vld [vmem:[%s198] sm:$0xff]
        %v200 = vld [vmem:[%s198 + $0x8] sm:$0xff]
        %v201 = vld [vmem:[%s198 + $0x10] sm:$0x3]
        %v202 = vld [vmem:[#allocation2] sm:$0xff]
        %v203 = vld [vmem:[#allocation2 + $0x8] sm:$0xff]
        %v204 = vld [vmem:[#allocation2 + $0x10] sm:$0xff]
        %v205 = vld [vmem:[#allocation2 + $0x18] sm:$0xff]
        %v206 = vld [vmem:[#allocation2 + $0x20] sm:$0xff]
        %v207 = vld [vmem:[#allocation2 + $0x28] sm:$0xff]
        %v208 = vld [vmem:[#allocation2 + $0x30] sm:$0xff]
        %v209 = vld [vmem:[#allocation2 + $0x38] sm:$0xff]
        %v210 = vld [vmem:[#allocation2 + $0x40] sm:$0xff]
        %s211 = scalar_lea.vmem [#allocation2], 72
        %v212 = vld [vmem:[%s211] sm:$0xff]
        %v213 = vld [vmem:[%s211 + $0x8] sm:$0xff]
        %v214 = vld [vmem:[%s211 + $0x10] sm:$0xff]
        %v215 = vld [vmem:[%s211 + $0x18] sm:$0xff]
        %v216 = vld [vmem:[%s211 + $0x20] sm:$0xff]
        %v217 = vld [vmem:[%s211 + $0x28] sm:$0xff]
        %v218 = vld [vmem:[%s211 + $0x30] sm:$0xff]
        %v219 = vld [vmem:[%s211 + $0x38] sm:$0xff]
        %v220 = vld [vmem:[%s211 + $0x40] sm:$0xff]
        %vm224 = vcmask 1046528
        %v225 = vrot.slane %v199, 1
        %v226 = vrot.slane %v200, 1
        %v227 = vsel %vm224, %v225, %v226
        %v228 = vrot.slane %v201, 1
        %v229 = vsel %vm224, %v226, %v228
        %vm230 = vcmask 588800
        %v231 = vsel %vm230, %v227, 0
        %v233 = vsel %vm230, %v229, 0
        %235 = vmatprep.subr.mxu0 0.0
        %236 = vmatpush1.msra.mxu0 %v212
        %237 = vmatprep.subr.mxu0 0.0
        %238 = vmatpush1.msra.mxu0 %v213
        %239 = vmatprep.subr.mxu0 0.0
        %240 = vmatpush1.msra.mxu0 %v214
        %241 = vmatprep.subr.mxu0 0.0
        %242 = vmatpush1.msra.mxu0 %v215
        %243 = vmatprep.subr.mxu0 0.0
        %244 = vmatpush1.msra.mxu0 %v216
        %245 = vmatprep.subr.mxu0 0.0
        %246 = vmatpush1.msra.mxu0 %v217
        %247 = vmatprep.subr.mxu0 0.0
        %248 = vmatpush1.msra.mxu0 %v218
        %249 = vmatprep.subr.mxu0 0.0
        %250 = vmatpush1.msra.mxu0 %v219
        %251 = vmatprep.subr.mxu0 0.0
        %252 = vmatpush1.msra.mxu0 %v220
        %253 = vmatprep.subr.mxu0 0.0
        %254 = vmatpush1.msra.mxu0 0.0
        %255 = vmatprep.subr.mxu0 0.0
        %256 = vmatpush1.msra.mxu0 0.0
        %257 = vmatprep.subr.mxu0 0.0
        %258 = vmatpush1.msra.mxu0 0.0
        %259 = vmatprep.subr.mxu0 0.0
        %260 = vmatpush1.msra.mxu0 0.0
        %261 = vmatprep.subr.mxu0 0.0
        %262 = vmatpush1.msra.mxu0 0.0
        %263 = vmatprep.subr.mxu0 0.0
        %264 = vmatpush1.msra.mxu0 0.0
        %265 = vmatprep.subr.mxu0 0.0
        %266 = vmatpush1.msra.mxu0 0.0
        %267 = vmatprep.subr.mxu0 0.0
        %268 = vmatpush1.msra.mxu0 0.0
        %269 = vmatprep.subr.mxu0 0.0
        %270 = vmatpush1.msra.mxu0 0.0
        %271 = vmatprep.subr.mxu0 0.0
        %272 = vmatpush1.msra.mxu0 0.0
        %273 = vmatprep.subr.mxu0 0.0
        %274 = vmatpush1.msra.mxu0 0.0
        %275 = vmatprep.subr.mxu0 0.0
        %276 = vmatpush1.msra.mxu0 0.0
        %277 = vmatprep.subr.mxu0 0.0
        %278 = vmatpush1.msra.mxu0 0.0
        %279 = vmatprep.subr.mxu0 0.0
        %280 = vmatpush1.msra.mxu0 0.0
        %281 = vmatprep.subr.mxu0 0.0
        %282 = vmatpush1.msra.mxu0 0.0
        %283 = vmatprep.subr.mxu0 0.0
        %284 = vmatpush1.msra.mxu0 0.0
        %285 = vmatprep.subr.mxu0 0.0
        %286 = vmatpush1.msra.mxu0 0.0
        %287 = vmatprep.subr.mxu0 0.0
        %288 = vmatpush1.msra.mxu0 0.0
        %289 = vmatprep.subr.mxu0 0.0
        %290 = vmatpush1.msra.mxu0 0.0
        %291 = vmatprep.subr.mxu0 0.0
        %292 = vmatpush1.msra.mxu0 0.0
        %293 = vmatprep.subr.mxu0 0.0
        %294 = vmatpush1.msra.mxu0 0.0
        %295 = vmatprep.subr.mxu0 0.0
        %296 = vmatpush1.msra.mxu0 0.0
        %297 = vmatprep.subr.mxu0 0.0
        %298 = vmatpush1.msra.mxu0 0.0
        %299 = vmatprep.mubr.f32.mxu0 0.0
        %300 = vmatmul.mubr.f32.gmra.mrb[0].mxu0 %v231
        %v301 = vpop.f32.mrb[0].mxu0
        %v302 = vadd.f32 0.0, %v301
        %v303 = vpop.f32.mrb[0].mxu0
        %304 = vmatprep.mubr.f32.mxu0 0.0
        %305 = vmatmul.mubr.f32.gmra.mrb[0].mxu0 %v233
        %v306 = vpop.f32.mrb[0].mxu0
        %v307 = vadd.f32 0.0, %v306
        %v308 = vpop.f32.mrb[0].mxu0
        %309 = vdwg.mxu0
        %v310 = vsel %vm230, %v199, 0
        %v312 = vsel %vm230, %v200, 0
        %314 = vmatprep.subr.mxu0 0.0
        %315 = vmatpush1.msra.mxu0 %v202
        %316 = vmatprep.subr.mxu0 0.0
        %317 = vmatpush1.msra.mxu0 %v203
        %318 = vmatprep.subr.mxu0 0.0
        %319 = vmatpush1.msra.mxu0 %v204
        %320 = vmatprep.subr.mxu0 0.0
        %321 = vmatpush1.msra.mxu0 %v205
        %322 = vmatprep.subr.mxu0 0.0
        %323 = vmatpush1.msra.mxu0 %v206
        %324 = vmatprep.subr.mxu0 0.0
        %325 = vmatpush1.msra.mxu0 %v207
        %326 = vmatprep.subr.mxu0 0.0
        %327 = vmatpush1.msra.mxu0 %v208
        %328 = vmatprep.subr.mxu0 0.0
        %329 = vmatpush1.msra.mxu0 %v209
        %330 = vmatprep.subr.mxu0 0.0
        %331 = vmatpush1.msra.mxu0 %v210
        %332 = vmatprep.subr.mxu0 0.0
        %333 = vmatpush1.msra.mxu0 0.0
        %334 = vmatprep.subr.mxu0 0.0
        %335 = vmatpush1.msra.mxu0 0.0
        %336 = vmatprep.subr.mxu0 0.0
        %337 = vmatpush1.msra.mxu0 0.0
        %338 = vmatprep.subr.mxu0 0.0
        %339 = vmatpush1.msra.mxu0 0.0
        %340 = vmatprep.subr.mxu0 0.0
        %341 = vmatpush1.msra.mxu0 0.0
        %342 = vmatprep.subr.mxu0 0.0
        %343 = vmatpush1.msra.mxu0 0.0
        %344 = vmatprep.subr.mxu0 0.0
        %345 = vmatpush1.msra.mxu0 0.0
        %346 = vmatprep.subr.mxu0 0.0
        %347 = vmatpush1.msra.mxu0 0.0
        %348 = vmatprep.subr.mxu0 0.0
        %349 = vmatpush1.msra.mxu0 0.0
        %350 = vmatprep.subr.mxu0 0.0
        %351 = vmatpush1.msra.mxu0 0.0
        %352 = vmatprep.subr.mxu0 0.0
        %353 = vmatpush1.msra.mxu0 0.0
        %354 = vmatprep.subr.mxu0 0.0
        %355 = vmatpush1.msra.mxu0 0.0
        %356 = vmatprep.subr.mxu0 0.0
        %357 = vmatpush1.msra.mxu0 0.0
        %358 = vmatprep.subr.mxu0 0.0
        %359 = vmatpush1.msra.mxu0 0.0
        %360 = vmatprep.subr.mxu0 0.0
        %361 = vmatpush1.msra.mxu0 0.0
        %362 = vmatprep.subr.mxu0 0.0
        %363 = vmatpush1.msra.mxu0 0.0
        %364 = vmatprep.subr.mxu0 0.0
        %365 = vmatpush1.msra.mxu0 0.0
        %366 = vmatprep.subr.mxu0 0.0
        %367 = vmatpush1.msra.mxu0 0.0
        %368 = vmatprep.subr.mxu0 0.0
        %369 = vmatpush1.msra.mxu0 0.0
        %370 = vmatprep.subr.mxu0 0.0
        %371 = vmatpush1.msra.mxu0 0.0
        %372 = vmatprep.subr.mxu0 0.0
        %373 = vmatpush1.msra.mxu0 0.0
        %374 = vmatprep.subr.mxu0 0.0
        %375 = vmatpush1.msra.mxu0 0.0
        %376 = vmatprep.subr.mxu0 0.0
        %377 = vmatpush1.msra.mxu0 0.0
        %378 = vmatprep.mubr.f32.mxu0 0.0
        %379 = vmatmul.mubr.f32.gmra.mrb[0].mxu0 %v310
        %v380 = vpop.f32.mrb[0].mxu0
        %v381 = vadd.f32 %v302, %v380
        %v382 = vpop.f32.mrb[0].mxu0
        %383 = vmatprep.mubr.f32.mxu0 0.0
        %384 = vmatmul.mubr.f32.gmra.mrb[0].mxu0 %v312
        %v385 = vpop.f32.mrb[0].mxu0
        %v386 = vadd.f32 %v307, %v385
        %v387 = vpop.f32.mrb[0].mxu0
        %388 = vdwg.mxu0
        %s389 = scalar_lea.vmem [#allocation2], 144
        %v390 = vld [vmem:[%s389] sm:$0xff]
        %v391 = vld [vmem:[%s389 + $0x8] sm:$0xff]
        %v392 = vld [vmem:[%s389 + $0x10] sm:$0xff]
        %v393 = vld [vmem:[%s389 + $0x18] sm:$0xff]
        %v394 = vld [vmem:[%s389 + $0x20] sm:$0xff]
        %v395 = vld [vmem:[%s389 + $0x28] sm:$0xff]
        %v396 = vld [vmem:[%s389 + $0x30] sm:$0xff]
        %v397 = vld [vmem:[%s389 + $0x38] sm:$0xff]
        %v398 = vld [vmem:[%s389 + $0x40] sm:$0xff]
        %vm399 = vcmask 1045504
        %v400 = vrot.slane %v199, 2
        %v401 = vrot.slane %v200, 2
        %v402 = vsel %vm399, %v400, %v401
        %v403 = vrot.slane %v201, 2
        %v404 = vsel %vm399, %v401, %v403
        %v405 = vsel %vm230, %v402, 0
        %v407 = vsel %vm230, %v404, 0
        %409 = vmatprep.subr.mxu0 0.0
        %410 = vmatpush1.msra.mxu0 %v390
        %411 = vmatprep.subr.mxu0 0.0
        %412 = vmatpush1.msra.mxu0 %v391
        %413 = vmatprep.subr.mxu0 0.0
        %414 = vmatpush1.msra.mxu0 %v392
        %415 = vmatprep.subr.mxu0 0.0
        %416 = vmatpush1.msra.mxu0 %v393
        %417 = vmatprep.subr.mxu0 0.0
        %418 = vmatpush1.msra.mxu0 %v394
        %419 = vmatprep.subr.mxu0 0.0
        %420 = vmatpush1.msra.mxu0 %v395
        %421 = vmatprep.subr.mxu0 0.0
        %422 = vmatpush1.msra.mxu0 %v396
        %423 = vmatprep.subr.mxu0 0.0
        %424 = vmatpush1.msra.mxu0 %v397
        %425 = vmatprep.subr.mxu0 0.0
        %426 = vmatpush1.msra.mxu0 %v398
        %427 = vmatprep.subr.mxu0 0.0
        %428 = vmatpush1.msra.mxu0 0.0
        %429 = vmatprep.subr.mxu0 0.0
        %430 = vmatpush1.msra.mxu0 0.0
        %431 = vmatprep.subr.mxu0 0.0
        %432 = vmatpush1.msra.mxu0 0.0
        %433 = vmatprep.subr.mxu0 0.0
        %434 = vmatpush1.msra.mxu0 0.0
        %435 = vmatprep.subr.mxu0 0.0
        %436 = vmatpush1.msra.mxu0 0.0
        %437 = vmatprep.subr.mxu0 0.0
        %438 = vmatpush1.msra.mxu0 0.0
        %439 = vmatprep.subr.mxu0 0.0
        %440 = vmatpush1.msra.mxu0 0.0
        %441 = vmatprep.subr.mxu0 0.0
        %442 = vmatpush1.msra.mxu0 0.0
        %443 = vmatprep.subr.mxu0 0.0
        %444 = vmatpush1.msra.mxu0 0.0
        %445 = vmatprep.subr.mxu0 0.0
        %446 = vmatpush1.msra.mxu0 0.0
        %447 = vmatprep.subr.mxu0 0.0
        %448 = vmatpush1.msra.mxu0 0.0
        %449 = vmatprep.subr.mxu0 0.0
        %450 = vmatpush1.msra.mxu0 0.0
        %451 = vmatprep.subr.mxu0 0.0
        %452 = vmatpush1.msra.mxu0 0.0
        %453 = vmatprep.subr.mxu0 0.0
        %454 = vmatpush1.msra.mxu0 0.0
        %455 = vmatprep.subr.mxu0 0.0
        %456 = vmatpush1.msra.mxu0 0.0
        %457 = vmatprep.subr.mxu0 0.0
        %458 = vmatpush1.msra.mxu0 0.0
        %459 = vmatprep.subr.mxu0 0.0
        %460 = vmatpush1.msra.mxu0 0.0
        %461 = vmatprep.subr.mxu0 0.0
        %462 = vmatpush1.msra.mxu0 0.0
        %463 = vmatprep.subr.mxu0 0.0
        %464 = vmatpush1.msra.mxu0 0.0
        %465 = vmatprep.subr.mxu0 0.0
        %466 = vmatpush1.msra.mxu0 0.0
        %467 = vmatprep.subr.mxu0 0.0
        %468 = vmatpush1.msra.mxu0 0.0
        %469 = vmatprep.subr.mxu0 0.0
        %470 = vmatpush1.msra.mxu0 0.0
        %471 = vmatprep.subr.mxu0 0.0
        %472 = vmatpush1.msra.mxu0 0.0
        %473 = vmatprep.mubr.f32.mxu0 0.0
        %474 = vmatmul.mubr.f32.gmra.mrb[0].mxu0 %v405
        %v475 = vpop.f32.mrb[0].mxu0
        %v476 = vadd.f32 0.0, %v475
        %v477 = vpop.f32.mrb[0].mxu0
        %478 = vmatprep.mubr.f32.mxu0 0.0
        %479 = vmatmul.mubr.f32.gmra.mrb[0].mxu0 %v407
        %v480 = vpop.f32.mrb[0].mxu0
        %v481 = vadd.f32 0.0, %v480
        %v482 = vpop.f32.mrb[0].mxu0
        %483 = vdwg.mxu0
        %v484 = vadd.f32 %v381, %v476
        %v485 = vadd.f32 %v386, %v481
        %v486 = vmax.f32 %v484, 0.0
        %v487 = vmax.f32 %v485, 0.0
        %vm490 = vcmask 1040384
        %v491 = vrot.slane %v486, 7
        %v492 = vrot.slane %v487, 7
        %v493 = vsel %vm490, %v491, %v492
        %v496 = vsel %vm490, 0.0, %v491
        %v497 = vsel %vm490, %v492, 0.0
        %v498 = vld [vmem:[#allocation5] sm:$0xff]
        %v499 = vld [vmem:[#allocation5 + $0x8] sm:$0xff]
        %v500 = vld [vmem:[#allocation5 + $0x10] sm:$0xff]
        %v501 = vld [vmem:[#allocation5 + $0x18] sm:$0xff]
        %v502 = vld [vmem:[#allocation5 + $0x20] sm:$0xff]
        %v503 = vld [vmem:[#allocation5 + $0x28] sm:$0xff]
        %v504 = vld [vmem:[#allocation5 + $0x30] sm:$0xff]
        %v505 = vld [vmem:[#allocation5 + $0x38] sm:$0xff]
        %v506 = vld [vmem:[#allocation5 + $0x40] sm:$0xff]
        %s507 = scalar_lea.vmem [#allocation5], 72
        %v508 = vld [vmem:[%s507] sm:$0xff]
        %v509 = vld [vmem:[%s507 + $0x8] sm:$0xff]
        %v510 = vld [vmem:[%s507 + $0x10] sm:$0xff]
        %v511 = vld [vmem:[%s507 + $0x18] sm:$0xff]
        %v512 = vld [vmem:[%s507 + $0x20] sm:$0xff]
        %v513 = vld [vmem:[%s507 + $0x28] sm:$0xff]
        %v514 = vld [vmem:[%s507 + $0x30] sm:$0xff]
        %v515 = vld [vmem:[%s507 + $0x38] sm:$0xff]
        %v516 = vld [vmem:[%s507 + $0x40] sm:$0xff]
        %v519 = vrot.slane %v496, 1
        %v520 = vrot.slane %v493, 1
        %v521 = vsel %vm224, %v519, %v520
        %v522 = vrot.slane %v497, 1
        %v523 = vsel %vm224, %v520, %v522
        %v524 = vsel %vm230, %v521, 0
        %v526 = vsel %vm230, %v523, 0
        %528 = vmatprep.subr.mxu0 0.0
        %529 = vmatpush1.msra.mxu0 %v508
        %530 = vmatprep.subr.mxu0 0.0
        %531 = vmatpush1.msra.mxu0 %v509
        %532 = vmatprep.subr.mxu0 0.0
        %533 = vmatpush1.msra.mxu0 %v510
        %534 = vmatprep.subr.mxu0 0.0
        %535 = vmatpush1.msra.mxu0 %v511
        %536 = vmatprep.subr.mxu0 0.0
        %537 = vmatpush1.msra.mxu0 %v512
        %538 = vmatprep.subr.mxu0 0.0
        %539 = vmatpush1.msra.mxu0 %v513
        %540 = vmatprep.subr.mxu0 0.0
        %541 = vmatpush1.msra.mxu0 %v514
        %542 = vmatprep.subr.mxu0 0.0
        %543 = vmatpush1.msra.mxu0 %v515
        %544 = vmatprep.subr.mxu0 0.0
        %545 = vmatpush1.msra.mxu0 %v516
        %546 = vmatprep.subr.mxu0 0.0
        %547 = vmatpush1.msra.mxu0 0.0
        %548 = vmatprep.subr.mxu0 0.0
        %549 = vmatpush1.msra.mxu0 0.0
        %550 = vmatprep.subr.mxu0 0.0
        %551 = vmatpush1.msra.mxu0 0.0
        %552 = vmatprep.subr.mxu0 0.0
        %553 = vmatpush1.msra.mxu0 0.0
        %554 = vmatprep.subr.mxu0 0.0
        %555 = vmatpush1.msra.mxu0 0.0
        %556 = vmatprep.subr.mxu0 0.0
        %557 = vmatpush1.msra.mxu0 0.0
        %558 = vmatprep.subr.mxu0 0.0
        %559 = vmatpush1.msra.mxu0 0.0
        %560 = vmatprep.subr.mxu0 0.0
        %561 = vmatpush1.msra.mxu0 0.0
        %562 = vmatprep.subr.mxu0 0.0
        %563 = vmatpush1.msra.mxu0 0.0
        %564 = vmatprep.subr.mxu0 0.0
        %565 = vmatpush1.msra.mxu0 0.0
        %566 = vmatprep.subr.mxu0 0.0
        %567 = vmatpush1.msra.mxu0 0.0
        %568 = vmatprep.subr.mxu0 0.0
        %569 = vmatpush1.msra.mxu0 0.0
        %570 = vmatprep.subr.mxu0 0.0
        %571 = vmatpush1.msra.mxu0 0.0
        %572 = vmatprep.subr.mxu0 0.0
        %573 = vmatpush1.msra.mxu0 0.0
        %574 = vmatprep.subr.mxu0 0.0
        %575 = vmatpush1.msra.mxu0 0.0
        %576 = vmatprep.subr.mxu0 0.0
        %577 = vmatpush1.msra.mxu0 0.0
        %578 = vmatprep.subr.mxu0 0.0
        %579 = vmatpush1.msra.mxu0 0.0
        %580 = vmatprep.subr.mxu0 0.0
        %581 = vmatpush1.msra.mxu0 0.0
        %582 = vmatprep.subr.mxu0 0.0
        %583 = vmatpush1.msra.mxu0 0.0
        %584 = vmatprep.subr.mxu0 0.0
        %585 = vmatpush1.msra.mxu0 0.0
        %586 = vmatprep.subr.mxu0 0.0
        %587 = vmatpush1.msra.mxu0 0.0
        %588 = vmatprep.subr.mxu0 0.0
        %589 = vmatpush1.msra.mxu0 0.0
        %590 = vmatprep.subr.mxu0 0.0
        %591 = vmatpush1.msra.mxu0 0.0
        %592 = vmatprep.mubr.f32.mxu0 0.0
        %593 = vmatmul.mubr.f32.gmra.mrb[0].mxu0 %v524
        %v594 = vpop.f32.mrb[0].mxu0
        %v595 = vadd.f32 0.0, %v594
        %v596 = vpop.f32.mrb[0].mxu0
        %597 = vmatprep.mubr.f32.mxu0 0.0
        %598 = vmatmul.mubr.f32.gmra.mrb[0].mxu0 %v526
        %v599 = vpop.f32.mrb[0].mxu0
        %v600 = vadd.f32 0.0, %v599
        %v601 = vpop.f32.mrb[0].mxu0
        %602 = vdwg.mxu0
        %v603 = vsel %vm230, %v496, 0
        %v605 = vsel %vm230, %v493, 0
        %607 = vmatprep.subr.mxu0 0.0
        %608 = vmatpush1.msra.mxu0 %v498
        %609 = vmatprep.subr.mxu0 0.0
        %610 = vmatpush1.msra.mxu0 %v499
        %611 = vmatprep.subr.mxu0 0.0
        %612 = vmatpush1.msra.mxu0 %v500
        %613 = vmatprep.subr.mxu0 0.0
        %614 = vmatpush1.msra.mxu0 %v501
        %615 = vmatprep.subr.mxu0 0.0
        %616 = vmatpush1.msra.mxu0 %v502
        %617 = vmatprep.subr.mxu0 0.0
        %618 = vmatpush1.msra.mxu0 %v503
        %619 = vmatprep.subr.mxu0 0.0
        %620 = vmatpush1.msra.mxu0 %v504
        %621 = vmatprep.subr.mxu0 0.0
        %622 = vmatpush1.msra.mxu0 %v505
        %623 = vmatprep.subr.mxu0 0.0
        %624 = vmatpush1.msra.mxu0 %v506
        %625 = vmatprep.subr.mxu0 0.0
        %626 = vmatpush1.msra.mxu0 0.0
        %627 = vmatprep.subr.mxu0 0.0
        %628 = vmatpush1.msra.mxu0 0.0
        %629 = vmatprep.subr.mxu0 0.0
        %630 = vmatpush1.msra.mxu0 0.0
        %631 = vmatprep.subr.mxu0 0.0
        %632 = vmatpush1.msra.mxu0 0.0
        %633 = vmatprep.subr.mxu0 0.0
        %634 = vmatpush1.msra.mxu0 0.0
        %635 = vmatprep.subr.mxu0 0.0
        %636 = vmatpush1.msra.mxu0 0.0
        %637 = vmatprep.subr.mxu0 0.0
        %638 = vmatpush1.msra.mxu0 0.0
        %639 = vmatprep.subr.mxu0 0.0
        %640 = vmatpush1.msra.mxu0 0.0
        %641 = vmatprep.subr.mxu0 0.0
        %642 = vmatpush1.msra.mxu0 0.0
        %643 = vmatprep.subr.mxu0 0.0
        %644 = vmatpush1.msra.mxu0 0.0
        %645 = vmatprep.subr.mxu0 0.0
        %646 = vmatpush1.msra.mxu0 0.0
        %647 = vmatprep.subr.mxu0 0.0
        %648 = vmatpush1.msra.mxu0 0.0
        %649 = vmatprep.subr.mxu0 0.0
        %650 = vmatpush1.msra.mxu0 0.0
        %651 = vmatprep.subr.mxu0 0.0
        %652 = vmatpush1.msra.mxu0 0.0
        %653 = vmatprep.subr.mxu0 0.0
        %654 = vmatpush1.msra.mxu0 0.0
        %655 = vmatprep.subr.mxu0 0.0
        %656 = vmatpush1.msra.mxu0 0.0
        %657 = vmatprep.subr.mxu0 0.0
        %658 = vmatpush1.msra.mxu0 0.0
        %659 = vmatprep.subr.mxu0 0.0
        %660 = vmatpush1.msra.mxu0 0.0
        %661 = vmatprep.subr.mxu0 0.0
        %662 = vmatpush1.msra.mxu0 0.0
        %663 = vmatprep.subr.mxu0 0.0
        %664 = vmatpush1.msra.mxu0 0.0
        %665 = vmatprep.subr.mxu0 0.0
        %666 = vmatpush1.msra.mxu0 0.0
        %667 = vmatprep.subr.mxu0 0.0
        %668 = vmatpush1.msra.mxu0 0.0
        %669 = vmatprep.subr.mxu0 0.0
        %670 = vmatpush1.msra.mxu0 0.0
        %671 = vmatprep.mubr.f32.mxu0 0.0
        %672 = vmatmul.mubr.f32.gmra.mrb[0].mxu0 %v603
        %v673 = vpop.f32.mrb[0].mxu0
        %v674 = vadd.f32 %v595, %v673
        %v675 = vpop.f32.mrb[0].mxu0
        %676 = vmatprep.mubr.f32.mxu0 0.0
        %677 = vmatmul.mubr.f32.gmra.mrb[0].mxu0 %v605
        %v678 = vpop.f32.mrb[0].mxu0
        %v679 = vadd.f32 %v600, %v678
        %v680 = vpop.f32.mrb[0].mxu0
        %681 = vdwg.mxu0
        %s682 = scalar_lea.vmem [#allocation5], 144
        %v683 = vld [vmem:[%s682] sm:$0xff]
        %v684 = vld [vmem:[%s682 + $0x8] sm:$0xff]
        %v685 = vld [vmem:[%s682 + $0x10] sm:$0xff]
        %v686 = vld [vmem:[%s682 + $0x18] sm:$0xff]
        %v687 = vld [vmem:[%s682 + $0x20] sm:$0xff]
        %v688 = vld [vmem:[%s682 + $0x28] sm:$0xff]
        %v689 = vld [vmem:[%s682 + $0x30] sm:$0xff]
        %v690 = vld [vmem:[%s682 + $0x38] sm:$0xff]
        %v691 = vld [vmem:[%s682 + $0x40] sm:$0xff]
        %v692 = vrot.slane %v496, 2
        %v693 = vrot.slane %v493, 2
        %v694 = vsel %vm399, %v692, %v693
        %v695 = vrot.slane %v497, 2
        %v696 = vsel %vm399, %v693, %v695
        %v697 = vsel %vm230, %v694, 0
        %v699 = vsel %vm230, %v696, 0
        %701 = vmatprep.subr.mxu0 0.0
        %702 = vmatpush1.msra.mxu0 %v683
        %703 = vmatprep.subr.mxu0 0.0
        %704 = vmatpush1.msra.mxu0 %v684
        %705 = vmatprep.subr.mxu0 0.0
        %706 = vmatpush1.msra.mxu0 %v685
        %707 = vmatprep.subr.mxu0 0.0
        %708 = vmatpush1.msra.mxu0 %v686
        %709 = vmatprep.subr.mxu0 0.0
        %710 = vmatpush1.msra.mxu0 %v687
        %711 = vmatprep.subr.mxu0 0.0
        %712 = vmatpush1.msra.mxu0 %v688
        %713 = vmatprep.subr.mxu0 0.0
        %714 = vmatpush1.msra.mxu0 %v689
        %715 = vmatprep.subr.mxu0 0.0
        %716 = vmatpush1.msra.mxu0 %v690
        %717 = vmatprep.subr.mxu0 0.0
        %718 = vmatpush1.msra.mxu0 %v691
        %719 = vmatprep.subr.mxu0 0.0
        %720 = vmatpush1.msra.mxu0 0.0
        %721 = vmatprep.subr.mxu0 0.0
        %722 = vmatpush1.msra.mxu0 0.0
        %723 = vmatprep.subr.mxu0 0.0
        %724 = vmatpush1.msra.mxu0 0.0
        %725 = vmatprep.subr.mxu0 0.0
        %726 = vmatpush1.msra.mxu0 0.0
        %727 = vmatprep.subr.mxu0 0.0
        %728 = vmatpush1.msra.mxu0 0.0
        %729 = vmatprep.subr.mxu0 0.0
        %730 = vmatpush1.msra.mxu0 0.0
        %731 = vmatprep.subr.mxu0 0.0
        %732 = vmatpush1.msra.mxu0 0.0
        %733 = vmatprep.subr.mxu0 0.0
        %734 = vmatpush1.msra.mxu0 0.0
        %735 = vmatprep.subr.mxu0 0.0
        %736 = vmatpush1.msra.mxu0 0.0
        %737 = vmatprep.subr.mxu0 0.0
        %738 = vmatpush1.msra.mxu0 0.0
        %739 = vmatprep.subr.mxu0 0.0
        %740 = vmatpush1.msra.mxu0 0.0
        %741 = vmatprep.subr.mxu0 0.0
        %742 = vmatpush1.msra.mxu0 0.0
        %743 = vmatprep.subr.mxu0 0.0
        %744 = vmatpush1.msra.mxu0 0.0
        %745 = vmatprep.subr.mxu0 0.0
        %746 = vmatpush1.msra.mxu0 0.0
        %747 = vmatprep.subr.mxu0 0.0
        %748 = vmatpush1.msra.mxu0 0.0
        %749 = vmatprep.subr.mxu0 0.0
        %750 = vmatpush1.msra.mxu0 0.0
        %751 = vmatprep.subr.mxu0 0.0
        %752 = vmatpush1.msra.mxu0 0.0
        %753 = vmatprep.subr.mxu0 0.0
        %754 = vmatpush1.msra.mxu0 0.0
        %755 = vmatprep.subr.mxu0 0.0
        %756 = vmatpush1.msra.mxu0 0.0
        %757 = vmatprep.subr.mxu0 0.0
        %758 = vmatpush1.msra.mxu0 0.0
        %759 = vmatprep.subr.mxu0 0.0
        %760 = vmatpush1.msra.mxu0 0.0
        %761 = vmatprep.subr.mxu0 0.0
        %762 = vmatpush1.msra.mxu0 0.0
        %763 = vmatprep.subr.mxu0 0.0
        %764 = vmatpush1.msra.mxu0 0.0
        %765 = vmatprep.mubr.f32.mxu0 0.0
        %766 = vmatmul.mubr.f32.gmra.mrb[0].mxu0 %v697
        %v767 = vpop.f32.mrb[0].mxu0
        %v768 = vadd.f32 0.0, %v767
        %v769 = vpop.f32.mrb[0].mxu0
        %770 = vmatprep.mubr.f32.mxu0 0.0
        %771 = vmatmul.mubr.f32.gmra.mrb[0].mxu0 %v699
        %v772 = vpop.f32.mrb[0].mxu0
        %v773 = vadd.f32 0.0, %v772
        %v774 = vpop.f32.mrb[0].mxu0
        %775 = vdwg.mxu0
        %v776 = vadd.f32 %v674, %v768
        %v777 = vadd.f32 %v679, %v773
        %v780 = vadd.f32 %v776, %v227
        %v781 = vadd.f32 %v777, %v229
        %v782 = vmax.f32 %v780, 0.0
        %v783 = vmax.f32 %v781, 0.0
        %784 = vst.msk [vmem:[%s193] sm:$0xff] %vm230, %v782
        %785 = vst.msk [vmem:[%s193 + $0x8] sm:$0xff] %vm230, %v783
        %s786 = sand.u32 %s95, 1
        %s787 = scalar_lea.sflag [#allocation4], %s786
        %s788 = sand.u32 %s95, 1
        %s789 = smul.addr %s788, 16
        %s790 = scalar_lea.vmem [#allocation7], %s789
        // Predicated region
        $region41: #{tpu_custom_call.1} parent=31 // pred_check
          %p791 = pneg %p105
        $region42: #{tpu_custom_call.1} parent=31 // pred_check_branch
          %793 = sbr.rel (%p791) target = $region44
        $region43: #{tpu_custom_call.1} parent=31 // pred_region
          %s795 = ssub.s32 256, 256
          %796 = vsyncadd %s787, %s795
          %s797 = smul.addr %s19, 2
          %s798 = smul.addr %s797, 128
          %s799 = scalar_lea.hbm %s3, %s798
          %s800 = sshll.u32 %s790, 4
          %s801 = int_to_ptr.vmem [resolvable:$true] %s800
          %806 = dma.vmem_to_hbm [thread:$0]  %s801, 256, %s799, %s787, 128, 128, 8
        $region44: #{tpu_custom_call.1} parent=31 // pred_fallthru
          _
      $region32: #{tpu_custom_call.1} parent=5 // pred_fallthru
        _
      %p807 = scmp.le.s32.totalorder 2, %s14
      // Predicated region
      $region45: #{tpu_custom_call.1} parent=5 // pred_check
        %p808 = pneg %p807
      $region46: #{tpu_custom_call.1} parent=5 // pred_check_branch
        %810 = sbr.rel (%p808) target = $region48
      $region47: #{tpu_custom_call.1} parent=5 // pred_region
        %s811 = ssub.s32 %s14, 2
        // Predicated region
        $region49: #{tpu_custom_call.1} parent=47 // pred_check
          %p812 = pneg %p111
        $region50: #{tpu_custom_call.1} parent=47 // pred_check_branch
          %814 = sbr.rel (%p812) target = $region52
        $region51: #{tpu_custom_call.1} parent=47 // pred_region
          %s815 = sand.u32 %s96, 1
          %s816 = scalar_lea.sflag [#allocation4], %s815
          %s817 = sand.u32 %s96, 1
          %s818 = smul.addr %s817, 16
          %s819 = scalar_lea.vmem [#allocation7], %s818
          %820 = dma.done %s816, 256
        $region52: #{tpu_custom_call.1} parent=47 // pred_fallthru
          _
      $region48: #{tpu_custom_call.1} parent=5 // pred_fallthru
        _
    $region6: #{tpu_custom_call.1} parent=1 // loop_footer
      %s18 = sadd.s32 1, %s14
    $region7: #{tpu_custom_call.1} parent=1 // loop_footer_branch
      %13 = sbr.rel target = $region3
    $region8: #{tpu_custom_call.1} parent=1 // loop_exit
      _
    %821 = vsyncpa [#allocation3], 1
    %s822 = scalar_lea.sflag [#allocation3], 1
    %823 = vsyncpa %s822, 1
    %824 = vsyncpa [#allocation6], 1
    %825 = vsyncpa [#allocation4], 1
    %s826 = scalar_lea.sflag [#allocation4], 1
    %827 = vsyncpa %s826, 1

</llo_original>
